<compile_context>
chip_gen: v7x
topology: tpu7x:2x2x1
jax: 0.10.0
libtpu: 0.0.40
codegen_flags: <defaults>
</compile_context>

<pallas_src>
import functools

import jax
import jax.numpy as jnp
from jax.experimental import pallas as pl
from jax.experimental.pallas import tpu as pltpu


# ---------------------------------------------------------------------------
# Fused Pallas kernel: K-tiled image projection + text gather + CLIP head
# ---------------------------------------------------------------------------
def _clip_loss_kernel(ids_ref,    # SMEM  (Bt*L,) int32 token ids (scalar prefetch)
                      img_ref,    # VMEM  (B_pad, TK)     bf16 image tile
                      wimg_ref,   # VMEM  (TK, D_pad)     bf16 folded image projection tile
                      wtxt_ref,   # VMEM  (V, 1, D_pad)   f32 folded text projection
                      o_ref,      # VMEM  (B_pad, Bt_pad) f32 loss output
                      acc_ref,    # VMEM scratch (B_pad, D_pad)  f32 image-feature accumulator
                      txt_ref,    # VMEM scratch (Bt_pad, D_pad) f32 text features
                      *, n_txt, seq_len, scale_c, loss_weight):
    k = pl.program_id(0)

    @pl.when(k == 0)
    def _init():
        acc_ref[...] = jnp.zeros_like(acc_ref)

    # K-tiled image projection; upsample + avg-pool is folded into wimg.
    # bf16 x bf16 -> f32 accumulation on the MXU.
    acc_ref[...] += jnp.dot(img_ref[...], wimg_ref[...],
                            preferred_element_type=jnp.float32)

    @pl.when(k == pl.num_programs(0) - 1)
    def _epilogue():
        # ---- Text path: SMEM-scalar-driven gather of projection rows. ----
        # (Sum over tokens; the 1/L mean is dropped, L2-normalize cancels it.)
        txt_ref[...] = jnp.zeros_like(txt_ref)      # padded rows stay zero
        for b in range(n_txt):
            row = wtxt_ref[ids_ref[b * seq_len], :, :]          # (1, D_pad)
            for l in range(1, seq_len):
                row = row + wtxt_ref[ids_ref[b * seq_len + l], :, :]
            txt_ref[pl.ds(b, 1), :] = row

        # ---- CLIP head: L2 normalize + scaled cosine logits + loss. ----
        eps = 1e-12
        img_feat = acc_ref[...]
        txt_feat = txt_ref[...]
        img_n = img_feat * jax.lax.rsqrt(
            jnp.sum(img_feat * img_feat, axis=-1, keepdims=True) + eps)
        txt_n = txt_feat * jax.lax.rsqrt(
            jnp.sum(txt_feat * txt_feat, axis=-1, keepdims=True) + eps)

        # loss = (1 - logit_scale * <img_n, txt_n> / 100) * loss_weight
        #      = loss_weight - scale_c * <img_n, txt_n>
        sim = jax.lax.dot_general(img_n, txt_n, (((1,), (1,)), ((), ())),
                                  preferred_element_type=jnp.float32)
        o_ref[...] = (loss_weight - scale_c * sim).astype(o_ref.dtype)


def clip_loss_fused(img_flat, w_img_full, text_ids_flat, txt_proj, *,
                    n_txt, seq_len, tk, logit_scale, loss_weight):
    """One pallas_call: K-tiled image proj, text gather, normalize, logits, loss."""
    b_pad, f_pad = img_flat.shape
    _, d_pad = w_img_full.shape
    v = txt_proj.shape[0]
    bt_pad = 128 * pl.cdiv(n_txt, 128)     # lane-dense output columns
    n_k = f_pad // tk

    kernel = functools.partial(
        _clip_loss_kernel,
        n_txt=int(n_txt), seq_len=int(seq_len),
        scale_c=float(logit_scale) * float(loss_weight) / 100.0,
        loss_weight=float(loss_weight))

    grid_spec = pltpu.PrefetchScalarGridSpec(
        num_scalar_prefetch=1,                       # text ids -> SMEM scalars
        grid=(n_k,),
        in_specs=[
            pl.BlockSpec((b_pad, tk), lambda k, ids: (0, k)),
            pl.BlockSpec((tk, d_pad), lambda k, ids: (k, 0)),
            pl.BlockSpec((v, 1, d_pad), lambda k, ids: (0, 0, 0)),
        ],
        out_specs=pl.BlockSpec((b_pad, bt_pad), lambda k, ids: (0, 0)),
        scratch_shapes=[
            pltpu.VMEM((b_pad, d_pad), jnp.float32),    # image-feature accumulator
            pltpu.VMEM((bt_pad, d_pad), jnp.float32),   # text features
        ],
    )

    return pl.pallas_call(
        kernel,
        out_shape=jax.ShapeDtypeStruct((b_pad, bt_pad), jnp.float32),
        grid_spec=grid_spec,
        compiler_params=pltpu.CompilerParams(
            dimension_semantics=("arbitrary",)),        # K axis is a reduction
    )(text_ids_flat, img_flat, w_img_full, txt_proj)


# ---------------------------------------------------------------------------
# Glue: parameters + module-level wrapper
# ---------------------------------------------------------------------------
def make_pool_matrix(in_size, scale_factor, pool_k):
    """A[o, h] = (1/k) * #{d in [0,k): (o*k + d) // s == h}.

    Exact matrix form of nn.Upsample(nearest, s) followed by AvgPool2d(k),
    applied per spatial axis: pooled = A @ X @ A.T.
    """
    o = jnp.arange((in_size * scale_factor) // pool_k)
    d = jnp.arange(pool_k)
    src = (o[:, None] * pool_k + d[None, :]) // scale_factor          # (Ho, k)
    return jnp.mean(jax.nn.one_hot(src, in_size, dtype=jnp.float32), axis=1)


class CLIPLossPallas:
    """Pallas re-implementation of mmagic CLIPLoss forward (fused, K-tiled)."""

    def __init__(self, key, in_size=16, scale_factor=7, pool_size=14,
                 in_channels=3, vocab_size=64, txt_dim=32, embed_dim=32,
                 loss_weight=1.0, tk=256):
        pool_k = scale_factor * in_size // pool_size
        out_hw = (scale_factor * in_size) // pool_k
        self.loss_weight = float(loss_weight)
        self.logit_scale = float(jnp.exp(jnp.log(1.0 / 0.07)))   # CLIP default
        self.vocab_size = vocab_size
        self.embed_dim = embed_dim
        self.tk = tk

        A = make_pool_matrix(in_size, scale_factor, pool_k)       # (Ho, H)
        self.pool_mat = A                                         # for reference()

        feat_in = in_channels * out_hw * out_hw
        k1, k2, k3 = jax.random.split(key, 3)
        self.w_img = 0.02 * jax.random.normal(k1, (feat_in, embed_dim), jnp.float32)
        self.tok_emb = 0.02 * jax.random.normal(k2, (vocab_size, txt_dim), jnp.float32)
        self.w_txt = 0.02 * jax.random.normal(k3, (txt_dim, embed_dim), jnp.float32)

        # Fold the (linear) upsample+avgpool into the image projection weight:
        # W_full[(c,h,w),d] = sum_{o,p} A[o,h] A[p,w] w_img[(c,o,p),d]   (exact)
        # NOTE: for large in_size this densified weight grows as H^2/Ho^2 vs the
        # factorized w_img; in that regime keep pooled = A @ X @ A^T in-kernel.
        w_img_r = self.w_img.reshape(in_channels, out_hw, out_hw, embed_dim)
        w_full = jnp.einsum('oh,pw,copd->chwd', A, A, w_img_r).reshape(
            in_channels * in_size * in_size, embed_dim)
        txt_proj = self.tok_emb @ self.w_txt                      # (V, D)

        # Pad to TPU-friendly shapes: D -> multiple of 128 lanes, F -> multiple
        # of the K tile; cast the big image-projection weight to bf16.
        self.feat_in_full = w_full.shape[0]
        self.d_pad = 128 * pl.cdiv(embed_dim, 128)
        self.f_pad = tk * pl.cdiv(self.feat_in_full, tk)
        w_full_p = jnp.zeros((self.f_pad, self.d_pad), jnp.float32)
        w_full_p = w_full_p.at[:self.feat_in_full, :embed_dim].set(w_full)
        self.w_img_full = w_full_p.astype(jnp.bfloat16)           # (F_pad, D_pad) bf16

        # Text projection stays f32 (tiny) and is shaped (V, 1, D_pad) so the
        # per-token gather is a dynamic index on the leading axis.
        tp = jnp.zeros((vocab_size, 1, self.d_pad), jnp.float32)
        self.txt_proj = tp.at[:, 0, :embed_dim].set(txt_proj)

    def __call__(self, image, text):
        # image: [B, C, H, W] float32 ; text: [Bt, L] int32 token ids
        B = image.shape[0]
        Bt, L = text.shape
        b_pad = 8 * pl.cdiv(B, 8)
        img_flat = image.reshape(B, -1).astype(jnp.bfloat16)
        img_pad = jnp.zeros((b_pad, self.f_pad), jnp.bfloat16)
        img_pad = img_pad.at[:B, :img_flat.shape[1]].set(img_flat)
        out = clip_loss_fused(
            img_pad, self.w_img_full, text.reshape(-1).astype(jnp.int32),
            self.txt_proj, n_txt=Bt, seq_len=L, tk=self.tk,
            logit_scale=self.logit_scale, loss_weight=self.loss_weight)
        return out[:B, :Bt]


# ---------------------------------------------------------------------------
# Pure-JAX references
# ---------------------------------------------------------------------------
def reference_folded(model, image, text):
    """Mirrors the kernel math (folded, padded, bf16-rounded) — tight check."""
    B = image.shape[0]
    F = model.feat_in_full
    img_flat = image.reshape(B, -1).astype(jnp.bfloat16).astype(jnp.float32)
    img_feat = img_flat @ model.w_img_full[:F].astype(jnp.float32)
    txt_feat = jnp.sum(model.txt_proj[text, 0, :], axis=1)
    eps = 1e-12
    img_n = img_feat * jax.lax.rsqrt(jnp.sum(img_feat**2, -1, keepdims=True) + eps)
    txt_n = txt_feat * jax.lax.rsqrt(jnp.sum(txt_feat**2, -1, keepdims=True) + eps)
    sim = img_n @ txt_n.T
    scale_c = model.logit_scale * model.loss_weight / 100.0
    return model.loss_weight - scale_c * sim


def reference_unfolded(model, image, text):
    """Un-folded f32 forward (checks the linear folds) — loose check (bf16 weights)."""
    B = image.shape[0]
    A = model.pool_mat
    pooled = jnp.einsum('oh,bchw,pw->bcop', A, image, A)
    img_feat = pooled.reshape(B, -1) @ model.w_img
    txt_feat = jnp.mean(jnp.take(model.tok_emb, text, axis=0), axis=1) @ model.w_txt
    eps = 1e-12
    img_n = img_feat * jax.lax.rsqrt(jnp.sum(img_feat**2, -1, keepdims=True) + eps)
    txt_n = txt_feat * jax.lax.rsqrt(jnp.sum(txt_feat**2, -1, keepdims=True) + eps)
    logits = model.logit_scale * img_n @ txt_n.T
    return (1.0 - logits / 100.0) * model.loss_weight


if __name__ == "__main__":
    key = jax.random.PRNGKey(0)
    k_img, k_txt, k_model = jax.random.split(key, 3)

    B, C, H = 2, 3, 16            # small NCHW image
    Bt, L = 2, 8                  # small text batch of token ids
    image = jax.random.normal(k_img, (B, C, H, H), jnp.float32)
    text = jax.random.randint(k_txt, (Bt, L), 0, 64, dtype=jnp.int32)

    model = CLIPLossPallas(k_model, in_size=H, scale_factor=7, pool_size=14,
                           in_channels=C, loss_weight=1.0)

    loss = model(image, text)
    jax.block_until_ready(loss)
    assert loss.shape == (B, Bt), loss.shape

    ref_tight = reference_folded(model, image, text)
    ref_loose = reference_unfolded(model, image, text)
    assert jnp.allclose(loss, ref_tight, rtol=1e-3, atol=1e-3), (loss, ref_tight)
    assert jnp.allclose(loss, ref_loose, rtol=1e-2, atol=1e-2), (loss, ref_loose)
    print("KERNEL_OK")
</pallas_src>

<mosaic_0001>
module attributes {stable_mosaic.version = 11 : i64} {
  func.func @_clip_loss_kernel(%arg0: i32, %arg1: memref<16xi32, #tpu.memory_space<smem>>, %arg2: memref<8x256xbf16, #tpu.memory_space<vmem>>, %arg3: memref<256x128xbf16, #tpu.memory_space<vmem>>, %arg4: memref<64x1x128xf32, #tpu.memory_space<vmem>>, %arg5: memref<8x128xf32, #tpu.memory_space<vmem>>, %arg6: memref<8x128xf32, #tpu.memory_space<vmem>>, %arg7: memref<128x128xf32, #tpu.memory_space<vmem>>) attributes {dimension_semantics = [#tpu.dimension_semantics<arbitrary>], iteration_bounds = array<i64: 3>, scalar_prefetch = 1 : i64, scratch_operands = 2 : i64, tpu.core_type = #tpu.core_type<tc>, window_params = [{transform_indices = @transform_0, window_bounds = array<i64: 8, 256>}, {transform_indices = @transform_1, window_bounds = array<i64: 256, 128>}, {pipeline_mode = #tpu.pipeline_mode<synchronous>, transform_indices = @transform_2, window_bounds = array<i64: 64, 1, 128>}, {pipeline_mode = #tpu.pipeline_mode<synchronous>, transform_indices = @transform_3, window_bounds = array<i64: 8, 128>}]} {
    %c0_i32 = arith.constant 0 : i32
    %0 = arith.cmpi eq, %arg0, %c0_i32 : i32
    %1 = arith.extui %0 : i1 to i32
    %c0_i32_0 = arith.constant 0 : i32
    %2 = arith.cmpi ne, %1, %c0_i32_0 : i32
    scf.if %2 {
      %cst_9 = arith.constant 0.000000e+00 : f32
      %12 = vector.broadcast %cst_9 : f32 to vector<8x128xf32>
      %c0_10 = arith.constant 0 : index
      %c0_11 = arith.constant 0 : index
      %13 = vector.load %arg6[%c0_10, %c0_11] : memref<8x128xf32, #tpu.memory_space<vmem>>, vector<8x128xf32>
      tpu.vector_store %arg6[%c0_10, %c0_11], %12 {strides = array<i32>} : memref<8x128xf32, #tpu.memory_space<vmem>>, vector<8x128xf32>,
    } else {
    }
    %c0 = arith.constant 0 : index
    %c0_1 = arith.constant 0 : index
    %3 = vector.load %arg6[%c0, %c0_1] : memref<8x128xf32, #tpu.memory_space<vmem>>, vector<8x128xf32>
    %c0_2 = arith.constant 0 : index
    %c0_3 = arith.constant 0 : index
    %4 = vector.load %arg2[%c0_2, %c0_3] : memref<8x256xbf16, #tpu.memory_space<vmem>>, vector<8x256xbf16>
    %c0_4 = arith.constant 0 : index
    %c0_5 = arith.constant 0 : index
    %5 = vector.load %arg3[%c0_4, %c0_5] : memref<256x128xbf16, #tpu.memory_space<vmem>>, vector<256x128xbf16>
    %cst = arith.constant dense<0.000000e+00> : vector<8x128xf32>
    %6 = tpu.matmul %4, %5, %cst {dimension_numbers = #tpu.dot_dimension_numbers<[1], [0], [0], [1], [0, 0, 1, 1], [], []>} : vector<8x256xbf16>, vector<256x128xbf16>, vector<8x128xf32> -> vector<8x128xf32>
    %7 = arith.addf %3, %6 : vector<8x128xf32>
    %c0_6 = arith.constant 0 : index
    %c0_7 = arith.constant 0 : index
    %8 = vector.load %arg6[%c0_6, %c0_7] : memref<8x128xf32, #tpu.memory_space<vmem>>, vector<8x128xf32>
    tpu.vector_store %arg6[%c0_6, %c0_7], %7 {strides = array<i32>} : memref<8x128xf32, #tpu.memory_space<vmem>>, vector<8x128xf32>,
    %c2_i32 = arith.constant 2 : i32
    %9 = arith.cmpi eq, %arg0, %c2_i32 : i32
    %10 = arith.extui %9 : i1 to i32
    %c0_i32_8 = arith.constant 0 : i32
    %11 = arith.cmpi ne, %10, %c0_i32_8 : i32
    scf.if %11 {
      %cst_9 = arith.constant 0.000000e+00 : f32
      %12 = vector.broadcast %cst_9 : f32 to vector<128x128xf32>
      %c0_10 = arith.constant 0 : index
      %c0_11 = arith.constant 0 : index
      %13 = vector.load %arg7[%c0_10, %c0_11] : memref<128x128xf32, #tpu.memory_space<vmem>>, vector<128x128xf32>
      tpu.vector_store %arg7[%c0_10, %c0_11], %12 {strides = array<i32>} : memref<128x128xf32, #tpu.memory_space<vmem>>, vector<128x128xf32>,
      %c0_12 = arith.constant 0 : index
      %14 = memref.load %arg1[%c0_12] : memref<16xi32, #tpu.memory_space<smem>>
      %15 = arith.index_cast %14 : i32 to index
      %c0_13 = arith.constant 0 : index
      %c0_14 = arith.constant 0 : index
      %16 = vector.load %arg4[%15, %c0_13, %c0_14] : memref<64x1x128xf32, #tpu.memory_space<vmem>>, vector<1x1x128xf32>
      %17 = vector.shape_cast %16 : vector<1x1x128xf32> to vector<1x128xf32>
      %c1 = arith.constant 1 : index
      %18 = memref.load %arg1[%c1] : memref<16xi32, #tpu.memory_space<smem>>
      %19 = arith.index_cast %18 : i32 to index
      %c0_15 = arith.constant 0 : index
      %c0_16 = arith.constant 0 : index
      %20 = vector.load %arg4[%19, %c0_15, %c0_16] : memref<64x1x128xf32, #tpu.memory_space<vmem>>, vector<1x1x128xf32>
      %21 = vector.shape_cast %20 : vector<1x1x128xf32> to vector<1x128xf32>
      %22 = arith.addf %17, %21 : vector<1x128xf32>
      %c2 = arith.constant 2 : index
      %23 = memref.load %arg1[%c2] : memref<16xi32, #tpu.memory_space<smem>>
      %24 = arith.index_cast %23 : i32 to index
      %c0_17 = arith.constant 0 : index
      %c0_18 = arith.constant 0 : index
      %25 = vector.load %arg4[%24, %c0_17, %c0_18] : memref<64x1x128xf32, #tpu.memory_space<vmem>>, vector<1x1x128xf32>
      %26 = vector.shape_cast %25 : vector<1x1x128xf32> to vector<1x128xf32>
      %27 = arith.addf %22, %26 : vector<1x128xf32>
      %c3 = arith.constant 3 : index
      %28 = memref.load %arg1[%c3] : memref<16xi32, #tpu.memory_space<smem>>
      %29 = arith.index_cast %28 : i32 to index
      %c0_19 = arith.constant 0 : index
      %c0_20 = arith.constant 0 : index
      %30 = vector.load %arg4[%29, %c0_19, %c0_20] : memref<64x1x128xf32, #tpu.memory_space<vmem>>, vector<1x1x128xf32>
      %31 = vector.shape_cast %30 : vector<1x1x128xf32> to vector<1x128xf32>
      %32 = arith.addf %27, %31 : vector<1x128xf32>
      %c4 = arith.constant 4 : index
      %33 = memref.load %arg1[%c4] : memref<16xi32, #tpu.memory_space<smem>>
      %34 = arith.index_cast %33 : i32 to index
      %c0_21 = arith.constant 0 : index
      %c0_22 = arith.constant 0 : index
      %35 = vector.load %arg4[%34, %c0_21, %c0_22] : memref<64x1x128xf32, #tpu.memory_space<vmem>>, vector<1x1x128xf32>
      %36 = vector.shape_cast %35 : vector<1x1x128xf32> to vector<1x128xf32>
      %37 = arith.addf %32, %36 : vector<1x128xf32>
      %c5 = arith.constant 5 : index
      %38 = memref.load %arg1[%c5] : memref<16xi32, #tpu.memory_space<smem>>
      %39 = arith.index_cast %38 : i32 to index
      %c0_23 = arith.constant 0 : index
      %c0_24 = arith.constant 0 : index
      %40 = vector.load %arg4[%39, %c0_23, %c0_24] : memref<64x1x128xf32, #tpu.memory_space<vmem>>, vector<1x1x128xf32>
      %41 = vector.shape_cast %40 : vector<1x1x128xf32> to vector<1x128xf32>
      %42 = arith.addf %37, %41 : vector<1x128xf32>
      %c6 = arith.constant 6 : index
      %43 = memref.load %arg1[%c6] : memref<16xi32, #tpu.memory_space<smem>>
      %44 = arith.index_cast %43 : i32 to index
      %c0_25 = arith.constant 0 : index
      %c0_26 = arith.constant 0 : index
      %45 = vector.load %arg4[%44, %c0_25, %c0_26] : memref<64x1x128xf32, #tpu.memory_space<vmem>>, vector<1x1x128xf32>
      %46 = vector.shape_cast %45 : vector<1x1x128xf32> to vector<1x128xf32>
      %47 = arith.addf %42, %46 : vector<1x128xf32>
      %c7 = arith.constant 7 : index
      %48 = memref.load %arg1[%c7] : memref<16xi32, #tpu.memory_space<smem>>
      %49 = arith.index_cast %48 : i32 to index
      %c0_27 = arith.constant 0 : index
      %c0_28 = arith.constant 0 : index
      %50 = vector.load %arg4[%49, %c0_27, %c0_28] : memref<64x1x128xf32, #tpu.memory_space<vmem>>, vector<1x1x128xf32>
      %51 = vector.shape_cast %50 : vector<1x1x128xf32> to vector<1x128xf32>
      %52 = arith.addf %47, %51 : vector<1x128xf32>
      %c0_29 = arith.constant 0 : index
      %c0_30 = arith.constant 0 : index
      %53 = vector.load %arg7[%c0_29, %c0_30] : memref<128x128xf32, #tpu.memory_space<vmem>>, vector<1x128xf32>
      tpu.vector_store %arg7[%c0_29, %c0_30], %52 {strides = array<i32>} : memref<128x128xf32, #tpu.memory_space<vmem>>, vector<1x128xf32>,
      %c8 = arith.constant 8 : index
      %54 = memref.load %arg1[%c8] : memref<16xi32, #tpu.memory_space<smem>>
      %55 = arith.index_cast %54 : i32 to index
      %c0_31 = arith.constant 0 : index
      %c0_32 = arith.constant 0 : index
      %56 = vector.load %arg4[%55, %c0_31, %c0_32] : memref<64x1x128xf32, #tpu.memory_space<vmem>>, vector<1x1x128xf32>
      %57 = vector.shape_cast %56 : vector<1x1x128xf32> to vector<1x128xf32>
      %c9 = arith.constant 9 : index
      %58 = memref.load %arg1[%c9] : memref<16xi32, #tpu.memory_space<smem>>
      %59 = arith.index_cast %58 : i32 to index
      %c0_33 = arith.constant 0 : index
      %c0_34 = arith.constant 0 : index
      %60 = vector.load %arg4[%59, %c0_33, %c0_34] : memref<64x1x128xf32, #tpu.memory_space<vmem>>, vector<1x1x128xf32>
      %61 = vector.shape_cast %60 : vector<1x1x128xf32> to vector<1x128xf32>
      %62 = arith.addf %57, %61 : vector<1x128xf32>
      %c10 = arith.constant 10 : index
      %63 = memref.load %arg1[%c10] : memref<16xi32, #tpu.memory_space<smem>>
      %64 = arith.index_cast %63 : i32 to index
      %c0_35 = arith.constant 0 : index
      %c0_36 = arith.constant 0 : index
      %65 = vector.load %arg4[%64, %c0_35, %c0_36] : memref<64x1x128xf32, #tpu.memory_space<vmem>>, vector<1x1x128xf32>
      %66 = vector.shape_cast %65 : vector<1x1x128xf32> to vector<1x128xf32>
      %67 = arith.addf %62, %66 : vector<1x128xf32>
      %c11 = arith.constant 11 : index
      %68 = memref.load %arg1[%c11] : memref<16xi32, #tpu.memory_space<smem>>
      %69 = arith.index_cast %68 : i32 to index
      %c0_37 = arith.constant 0 : index
      %c0_38 = arith.constant 0 : index
      %70 = vector.load %arg4[%69, %c0_37, %c0_38] : memref<64x1x128xf32, #tpu.memory_space<vmem>>, vector<1x1x128xf32>
      %71 = vector.shape_cast %70 : vector<1x1x128xf32> to vector<1x128xf32>
      %72 = arith.addf %67, %71 : vector<1x128xf32>
      %c12 = arith.constant 12 : index
      %73 = memref.load %arg1[%c12] : memref<16xi32, #tpu.memory_space<smem>>
      %74 = arith.index_cast %73 : i32 to index
      %c0_39 = arith.constant 0 : index
      %c0_40 = arith.constant 0 : index
      %75 = vector.load %arg4[%74, %c0_39, %c0_40] : memref<64x1x128xf32, #tpu.memory_space<vmem>>, vector<1x1x128xf32>
      %76 = vector.shape_cast %75 : vector<1x1x128xf32> to vector<1x128xf32>
      %77 = arith.addf %72, %76 : vector<1x128xf32>
      %c13 = arith.constant 13 : index
      %78 = memref.load %arg1[%c13] : memref<16xi32, #tpu.memory_space<smem>>
      %79 = arith.index_cast %78 : i32 to index
      %c0_41 = arith.constant 0 : index
      %c0_42 = arith.constant 0 : index
      %80 = vector.load %arg4[%79, %c0_41, %c0_42] : memref<64x1x128xf32, #tpu.memory_space<vmem>>, vector<1x1x128xf32>
      %81 = vector.shape_cast %80 : vector<1x1x128xf32> to vector<1x128xf32>
      %82 = arith.addf %77, %81 : vector<1x128xf32>
      %c14 = arith.constant 14 : index
      %83 = memref.load %arg1[%c14] : memref<16xi32, #tpu.memory_space<smem>>
      %84 = arith.index_cast %83 : i32 to index
      %c0_43 = arith.constant 0 : index
      %c0_44 = arith.constant 0 : index
      %85 = vector.load %arg4[%84, %c0_43, %c0_44] : memref<64x1x128xf32, #tpu.memory_space<vmem>>, vector<1x1x128xf32>
      %86 = vector.shape_cast %85 : vector<1x1x128xf32> to vector<1x128xf32>
      %87 = arith.addf %82, %86 : vector<1x128xf32>
      %c15 = arith.constant 15 : index
      %88 = memref.load %arg1[%c15] : memref<16xi32, #tpu.memory_space<smem>>
      %89 = arith.index_cast %88 : i32 to index
      %c0_45 = arith.constant 0 : index
      %c0_46 = arith.constant 0 : index
      %90 = vector.load %arg4[%89, %c0_45, %c0_46] : memref<64x1x128xf32, #tpu.memory_space<vmem>>, vector<1x1x128xf32>
      %91 = vector.shape_cast %90 : vector<1x1x128xf32> to vector<1x128xf32>
      %92 = arith.addf %87, %91 : vector<1x128xf32>
      %c1_47 = arith.constant 1 : index
      %c0_48 = arith.constant 0 : index
      %93 = vector.load %arg7[%c1_47, %c0_48] : memref<128x128xf32, #tpu.memory_space<vmem>>, vector<1x128xf32>
      tpu.vector_store %arg7[%c1_47, %c0_48], %92 {strides = array<i32>} : memref<128x128xf32, #tpu.memory_space<vmem>>, vector<1x128xf32>,
      %c0_49 = arith.constant 0 : index
      %c0_50 = arith.constant 0 : index
      %94 = vector.load %arg6[%c0_49, %c0_50] : memref<8x128xf32, #tpu.memory_space<vmem>>, vector<8x128xf32>
      %c0_51 = arith.constant 0 : index
      %c0_52 = arith.constant 0 : index
      %95 = vector.load %arg7[%c0_51, %c0_52] : memref<128x128xf32, #tpu.memory_space<vmem>>, vector<128x128xf32>
      %96 = arith.mulf %94, %94 : vector<8x128xf32>
      %cst_53 = arith.constant dense<0.000000e+00> : vector<8xf32>
      %97 = vector.multi_reduction <add>, %96, %cst_53 [1] : vector<8x128xf32> to vector<8xf32>
      %98 = vector.shape_cast %97 : vector<8xf32> to vector<8x1xf32>
      %cst_54 = arith.constant 9.99999996E-13 : f32
      %99 = vector.broadcast %cst_54 : f32 to vector<8x1xf32>
      %100 = arith.addf %98, %99 : vector<8x1xf32>
      %101 = math.rsqrt %100 : vector<8x1xf32>
      %102 = vector.broadcast %101 : vector<8x1xf32> to vector<8x128xf32>
      %103 = arith.mulf %94, %102 : vector<8x128xf32>
      %104 = arith.mulf %95, %95 : vector<128x128xf32>
      %cst_55 = arith.constant dense<0.000000e+00> : vector<128xf32>
      %105 = vector.multi_reduction <add>, %104, %cst_55 [1] : vector<128x128xf32> to vector<128xf32>
      %106 = vector.shape_cast %105 : vector<128xf32> to vector<128x1xf32>
      %cst_56 = arith.constant 9.99999996E-13 : f32
      %107 = vector.broadcast %cst_56 : f32 to vector<128x1xf32>
      %108 = arith.addf %106, %107 : vector<128x1xf32>
      %109 = math.rsqrt %108 : vector<128x1xf32>
      %110 = vector.broadcast %109 : vector<128x1xf32> to vector<128x128xf32>
      %111 = arith.mulf %95, %110 : vector<128x128xf32>
      %cst_57 = arith.constant dense<0.000000e+00> : vector<8x128xf32>
      %112 = tpu.matmul %103, %111, %cst_57 {dimension_numbers = #tpu.dot_dimension_numbers<[1], [1], [0], [0], [0, 0, 1, 0], [], []>} : vector<8x128xf32>, vector<128x128xf32>, vector<8x128xf32> -> vector<8x128xf32>
      %cst_58 = arith.constant 0.142857134 : f32
      %113 = vector.broadcast %cst_58 : f32 to vector<8x128xf32>
      %114 = arith.mulf %113, %112 : vector<8x128xf32>
      %cst_59 = arith.constant 1.000000e+00 : f32
      %115 = vector.broadcast %cst_59 : f32 to vector<8x128xf32>
      %116 = arith.subf %115, %114 : vector<8x128xf32>
      %c0_60 = arith.constant 0 : index
      %c0_61 = arith.constant 0 : index
      %117 = vector.load %arg5[%c0_60, %c0_61] : memref<8x128xf32, #tpu.memory_space<vmem>>, vector<8x128xf32>
      tpu.vector_store %arg5[%c0_60, %c0_61], %116 {strides = array<i32>} : memref<8x128xf32, #tpu.memory_space<vmem>>, vector<8x128xf32>,
    } else {
    }
    return
  }
  func.func @transform_0(%arg0: i32, %arg1: memref<16xi32, #tpu.memory_space<smem>>) -> (i32, i32) {
    %c0_i32 = arith.constant 0 : i32
    %c0_i32_0 = arith.constant 0 : i32
    return %c0_i32, %arg0 : i32, i32
  }
  func.func @transform_1(%arg0: i32, %arg1: memref<16xi32, #tpu.memory_space<smem>>) -> (i32, i32) {
    %c0_i32 = arith.constant 0 : i32
    %c0_i32_0 = arith.constant 0 : i32
    return %arg0, %c0_i32 : i32, i32
  }
  func.func @transform_2(%arg0: i32, %arg1: memref<16xi32, #tpu.memory_space<smem>>) -> (i32, i32, i32) {
    %c0_i32 = arith.constant 0 : i32
    %c0_i32_0 = arith.constant 0 : i32
    %c0_i32_1 = arith.constant 0 : i32
    %c0_i32_2 = arith.constant 0 : i32
    return %c0_i32, %c0_i32_0, %c0_i32_1 : i32, i32, i32
  }
  func.func @transform_3(%arg0: i32, %arg1: memref<16xi32, #tpu.memory_space<smem>>) -> (i32, i32) {
    %c0_i32 = arith.constant 0 : i32
    %c0_i32_0 = arith.constant 0 : i32
    %c0_i32_1 = arith.constant 0 : i32
    return %c0_i32, %c0_i32_0 : i32, i32
  }
}

</mosaic_0001>

<llo_original>
// kernel: tpu_custom_call.1
$region0: #{tpu_custom_call.1}
  #allocation0 [shape = 'u32[]', space=smem, size = 0x4, offset = 0x4, fixed_abs, tag = 'smem constant byte address 0x4 - core index']
  #allocation1 [shape = 'u32[144,128]{1,0:T(1,128)}', space=vmem, size = 0x12000, scoped, tag = 'internal scratch']
  #allocation2 [shape = 'f32[8,128]{1,0:T(8,128)}', space=vmem, size = 0x1000, scoped, tag = 'scratch operand']
  #allocation3 [shape = 'f32[128,128]{1,0:T(8,128)}', space=vmem, size = 0x10000, scoped, tag = 'scratch operand']
  #allocation4 [shape = 's32[1]{0}', space=sflag, size = 0x4, scoped, tag = 'scoped memory for tpu_custom_call.1']
  #allocation5 [shape = 'u8[512]{0}', space=smem, size = 0x200, scoped, tag = 'prefetched SMEM operand 0']
  %s0 = inlined_call_operand.hbm [shape: s32[16], index: 0, kind: input, shape index: {}]
  %s1 = inlined_call_operand.hbm [shape: bf16[8,768], index: 1, kind: input, shape index: {}]
  %s2 = inlined_call_operand.hbm [shape: bf16[768,128], index: 2, kind: input, shape index: {}]
  %s3 = inlined_call_operand.hbm [shape: f32[64,1,128], index: 3, kind: input, shape index: {}]
  %s4 = inlined_call_operand.hbm [shape: f32[8,128], index: 4, kind: output, shape index: {}]
  %s5 = sld [smem:[#allocation0]]
  $region65: #{tpu_custom_call.1} parent=0
    _
  %s7 = ssub.s32 1, %s5
  %s8 = scalar_select 0, %s7, %s5
  %10 = dma.hbm_to_smem %s0, 16, [#allocation5], [#allocation4]
  %11 = dma.done [#allocation4], 16
  %12 = sfence
  $region1: #{tpu_custom_call.1} parent=0
    #allocation6 [shape = 'u8[8192]{0}', space=vmem, size = 0x2000, scoped, tag = 'input window, operand 1']
    #allocation7 [shape = 's32[2]{0}', space=sflag, size = 0x8, scoped, tag = 'scoped memory for tpu_custom_call.1']
    #allocation8 [shape = 's32[2]{0}', space=sflag, size = 0x8, scoped, tag = 'scoped memory for tpu_custom_call.1']
    #allocation9 [shape = 'u8[131072]{0}', space=vmem, size = 0x20000, scoped, tag = 'input window, operand 2']
    #allocation10 [shape = 's32[2]{0}', space=sflag, size = 0x8, scoped, tag = 'scoped memory for tpu_custom_call.1']
    #allocation11 [shape = 'u8[32768]{0}', space=vmem, size = 0x8000, scoped, tag = 'input window, operand 3, single buffered']
    #allocation12 [shape = 'u8[4096]{0}', space=vmem, size = 0x1000, scoped, tag = 'output window, operand 0, single buffered']
    %13 = vsyncpa [#allocation7], 0
    %s14 = scalar_lea.sflag [#allocation7], 1
    %15 = vsyncpa %s14, 0
    %16 = vsyncpa [#allocation10], 0
    %s17 = scalar_lea.sflag [#allocation10], 1
    %18 = vsyncpa %s17, 0
    %19 = vsyncpa [#allocation8], 0
    loop: start=0, step=1, limit=5
    $region2: #{tpu_custom_call.1} parent=1 // loop_pre_header
      _
    $region3: #{tpu_custom_call.1} parent=1 // loop_header
      %s21 = sphi 0, %s25
      %p22 = scmp.ge.s32.totalorder %s21, 5
      %s31 = sphi 0, %s33
      %s34 = sphi 0, %s31
      %s35 = sphi 0, %s34
      %s51 = sphi 0, %s35
      %s57 = sphi 0, %s59
      %s60 = sphi 0, %s57
      %s61 = sphi 0, %s60
      %s77 = sphi 0, %s61
      %s81 = sphi 0, %s81
      %s83 = sphi 0, %s81
      %s84 = sphi 0, %s83
      %s98 = sphi 0, %s84
      %s102 = sphi 0, %s102
      %s104 = sphi 0, %s102
      %s105 = sphi 0, %s104
      %s119 = sphi 0, %s105
    $region4: #{tpu_custom_call.1} parent=1 // loop_header_branch
      %24 = sbr.rel (%p22) target = $region8
    $region5: #{tpu_custom_call.1} parent=1 // loop_body
      %s26 = ssub.s32 %s21, 1
      %s27 = ssub.s32 %s21, 2
      %s28 = sadd.s32 %s21, 1
      %s29 = ssub.s32 %s21, %s28
      %p30 = scmp.eq.s32.totalorder %s29, 0
      %s32 = sadd.s32 %s31, 1
      %s33 = scalar_select %p30, %s31, %s32
      %p36 = pneg %p30
      %p37 = scmp.eq.s32.totalorder %s21, 2
      %p38 = por %p36, %p37
      %p39 = scmp.ne.s32.totalorder %s31, %s34
      %p40 = scmp.eq.s32.totalorder %s21, 0
      %p41 = por %p39, %p40
      %p42 = scmp.ne.s32.totalorder %s31, %s34
      %p43 = scmp.eq.s32.totalorder %s26, 2
      %p44 = por %p42, %p43
      %p45 = scmp.ne.s32.totalorder %s34, %s35
      %p46 = scmp.eq.s32.totalorder %s26, 0
      %p47 = por %p45, %p46
      %p48 = scmp.ne.s32.totalorder %s34, %s35
      %p49 = scmp.eq.s32.totalorder %s27, 2
      %p50 = por %p48, %p49
      %p52 = scmp.ne.s32.totalorder %s35, %s51
      %p53 = scmp.eq.s32.totalorder %s27, 0
      %p54 = por %p52, %p53
      %s55 = ssub.s32 %s21, %s28
      %p56 = scmp.eq.s32.totalorder %s55, 0
      %s58 = sadd.s32 %s57, 1
      %s59 = scalar_select %p56, %s57, %s58
      %p62 = pneg %p56
      %p63 = scmp.eq.s32.totalorder %s21, 2
      %p64 = por %p62, %p63
      %p65 = scmp.ne.s32.totalorder %s57, %s60
      %p66 = scmp.eq.s32.totalorder %s21, 0
      %p67 = por %p65, %p66
      %p68 = scmp.ne.s32.totalorder %s57, %s60
      %p69 = scmp.eq.s32.totalorder %s26, 2
      %p70 = por %p68, %p69
      %p71 = scmp.ne.s32.totalorder %s60, %s61
      %p72 = scmp.eq.s32.totalorder %s26, 0
      %p73 = por %p71, %p72
      %p74 = scmp.ne.s32.totalorder %s60, %s61
      %p75 = scmp.eq.s32.totalorder %s27, 2
      %p76 = por %p74, %p75
      %p78 = scmp.ne.s32.totalorder %s61, %s77
      %p79 = scmp.eq.s32.totalorder %s27, 0
      %p80 = por %p78, %p79
      %s82 = sadd.s32 %s81, 1
      %p85 = scmp.eq.s32.totalorder %s21, 2
      %p86 = scmp.ne.s32.totalorder %s81, %s83
      %p87 = scmp.eq.s32.totalorder %s21, 0
      %p88 = por %p86, %p87
      %p89 = scmp.ne.s32.totalorder %s81, %s83
      %p90 = scmp.eq.s32.totalorder %s26, 2
      %p91 = por %p89, %p90
      %p92 = scmp.ne.s32.totalorder %s83, %s84
      %p93 = scmp.eq.s32.totalorder %s26, 0
      %p94 = por %p92, %p93
      %p95 = scmp.ne.s32.totalorder %s83, %s84
      %p96 = scmp.eq.s32.totalorder %s27, 2
      %p97 = por %p95, %p96
      %p99 = scmp.ne.s32.totalorder %s84, %s98
      %p100 = scmp.eq.s32.totalorder %s27, 0
      %p101 = por %p99, %p100
      %s103 = sadd.s32 %s102, 1
      %p106 = scmp.eq.s32.totalorder %s21, 2
      %p107 = scmp.ne.s32.totalorder %s102, %s104
      %p108 = scmp.eq.s32.totalorder %s21, 0
      %p109 = por %p107, %p108
      %p110 = scmp.ne.s32.totalorder %s102, %s104
      %p111 = scmp.eq.s32.totalorder %s26, 2
      %p112 = por %p110, %p111
      %p113 = scmp.ne.s32.totalorder %s104, %s105
      %p114 = scmp.eq.s32.totalorder %s26, 0
      %p115 = por %p113, %p114
      %p116 = scmp.ne.s32.totalorder %s104, %s105
      %p117 = scmp.eq.s32.totalorder %s27, 2
      %p118 = por %p116, %p117
      %p120 = scmp.ne.s32.totalorder %s105, %s119
      %p121 = scmp.eq.s32.totalorder %s27, 0
      %p122 = por %p120, %p121
      %p123 = scmp.le.s32.totalorder 1, %s21
      %p124 = scmp.lt.s32.totalorder %s21, 4
      %p125 = pnand %p123, %p124
      %p126 = pneg %p125
      // Predicated region
      $region9: #{tpu_custom_call.1} parent=5 // pred_check
        _
      $region10: #{tpu_custom_call.1} parent=5 // pred_check_branch
        %128 = sbr.rel (%p125) target = $region12
      $region11: #{tpu_custom_call.1} parent=5 // pred_region
        %s129 = ssub.s32 %s21, 1
        // Predicated region
        $region13: #{tpu_custom_call.1} parent=11 // pred_check
          %p130 = pneg %p94
        $region14: #{tpu_custom_call.1} parent=11 // pred_check_branch
          %132 = sbr.rel (%p130) target = $region16
        $region15: #{tpu_custom_call.1} parent=11 // pred_region
          %s134 = ssub.s32 1024, 1024
          %135 = vsyncadd [#allocation10], %s134
          %s136 = sshll.u32 [#allocation11], 4
          %s137 = int_to_ptr.vmem [resolvable:$true] %s136
          %142 = dma.hbm_to_vmem [thread:$0]  %s3, 1024, %s137, [#allocation10], 16, 16, 1
        $region16: #{tpu_custom_call.1} parent=11 // pred_fallthru
          _
      $region12: #{tpu_custom_call.1} parent=5 // pred_fallthru
        _
      %p143 = scmp.lt.s32.totalorder %s21, 3
      // Predicated region
      $region17: #{tpu_custom_call.1} parent=5 // pred_check
        %p144 = pneg %p143
      $region18: #{tpu_custom_call.1} parent=5 // pred_check_branch
        %146 = sbr.rel (%p144) target = $region20
      $region19: #{tpu_custom_call.1} parent=5 // pred_region
        // Predicated region
        $region21: #{tpu_custom_call.1} parent=19 // pred_check
          %p147 = pneg %p41
        $region22: #{tpu_custom_call.1} parent=19 // pred_check_branch
          %149 = sbr.rel (%p147) target = $region24
        $region23: #{tpu_custom_call.1} parent=19 // pred_region
          %s150 = sand.u32 %s31, 1
          %s151 = scalar_lea.sflag [#allocation7], %s150
          %s152 = sand.u32 %s31, 1
          %s153 = smul.addr %s152, 8
          %s154 = scalar_lea.vmem [#allocation6], %s153
          %s155 = smul.u32 2, %s21
          %s157 = ssub.s32 128, 128
          %158 = vsyncadd %s151, %s157
          %s159 = smul.addr %s155, 64
          %s160 = scalar_lea.hbm %s1, %s159
          %s162 = sshll.u32 %s154, 4
          %s163 = int_to_ptr.vmem [resolvable:$true] %s162
          %165 = dma.hbm_to_vmem [thread:$0]  %s160, 128, %s163, %s151
        $region24: #{tpu_custom_call.1} parent=19 // pred_fallthru
          _
        // Predicated region
        $region25: #{tpu_custom_call.1} parent=19 // pred_check
          %p166 = pneg %p67
        $region26: #{tpu_custom_call.1} parent=19 // pred_check_branch
          %168 = sbr.rel (%p166) target = $region28
        $region27: #{tpu_custom_call.1} parent=19 // pred_region
          %s169 = sand.u32 %s21, 1
          %s170 = scalar_lea.sflag [#allocation10], %s169
          %s171 = sand.u32 %s57, 1
          %s172 = smul.addr %s171, 128
          %s173 = scalar_lea.vmem [#allocation9], %s172
          %s174 = smul.u32 32, %s21
          %s176 = ssub.s32 2048, 2048
          %177 = vsyncadd %s170, %s176
          %s178 = smul.addr %s174, 64
          %s179 = scalar_lea.hbm %s2, %s178
          %s180 = sshll.u32 %s173, 4
          %s181 = int_to_ptr.vmem [resolvable:$true] %s180
          %186 = dma.hbm_to_vmem [thread:$0]  %s179, 2048, %s181, %s170, 64, 64, 4
        $region28: #{tpu_custom_call.1} parent=19 // pred_fallthru
          _
      $region20: #{tpu_custom_call.1} parent=5 // pred_fallthru
        _
      %p187 = scmp.le.s32.totalorder 1, %s21
      %p188 = scmp.lt.s32.totalorder %s21, 4
      %p189 = pnand %p187, %p188
      %p190 = pneg %p189
      // Predicated region
      $region29: #{tpu_custom_call.1} parent=5 // pred_check
        _
      $region30: #{tpu_custom_call.1} parent=5 // pred_check_branch
        %192 = sbr.rel (%p189) target = $region32
      $region31: #{tpu_custom_call.1} parent=5 // pred_region
        %s193 = ssub.s32 %s21, 1
        %s194 = sand.u32 %s34, 1
        %s195 = scalar_lea.sflag [#allocation7], %s194
        %s196 = sand.u32 %s34, 1
        %s197 = smul.addr %s196, 8
        %s198 = scalar_lea.vmem [#allocation6], %s197
        // Predicated region
        $region33: #{tpu_custom_call.1} parent=31 // pred_check
          %p199 = pneg %p47
        $region34: #{tpu_custom_call.1} parent=31 // pred_check_branch
          %201 = sbr.rel (%p199) target = $region36
        $region35: #{tpu_custom_call.1} parent=31 // pred_region
          %202 = dma.done %s195, 128
        $region36: #{tpu_custom_call.1} parent=31 // pred_fallthru
          _
        %s203 = sand.u32 %s26, 1
        %s204 = scalar_lea.sflag [#allocation10], %s203
        %s205 = sand.u32 %s60, 1
        %s206 = smul.addr %s205, 128
        %s207 = scalar_lea.vmem [#allocation9], %s206
        // Predicated region
        $region37: #{tpu_custom_call.1} parent=31 // pred_check
          %p208 = pneg %p73
        $region38: #{tpu_custom_call.1} parent=31 // pred_check_branch
          %210 = sbr.rel (%p208) target = $region40
        $region39: #{tpu_custom_call.1} parent=31 // pred_region
          %211 = dma.done %s204, 2048
        $region40: #{tpu_custom_call.1} parent=31 // pred_fallthru
          _
        // Predicated region
        $region41: #{tpu_custom_call.1} parent=31 // pred_check
          %p212 = pneg %p94
        $region42: #{tpu_custom_call.1} parent=31 // pred_check_branch
          %214 = sbr.rel (%p212) target = $region44
        $region43: #{tpu_custom_call.1} parent=31 // pred_region
          %215 = dma.done [#allocation10], 1024
        $region44: #{tpu_custom_call.1} parent=31 // pred_fallthru
          _
        %s216 = sand.u32 %s34, 1
        %s217 = scalar_lea.sflag [#allocation7], %s216
        %s218 = sand.u32 %s34, 1
        %s219 = smul.addr %s218, 8
        %s220 = scalar_lea.vmem [#allocation6], %s219
        %p221 = pneg %p47
        %p222 = pneg %p44
        %s223 = sand.u32 %s26, 1
        %s224 = scalar_lea.sflag [#allocation10], %s223
        %s225 = sand.u32 %s60, 1
        %s226 = smul.addr %s225, 128
        %s227 = scalar_lea.vmem [#allocation9], %s226
        %p228 = pneg %p73
        %p229 = pneg %p70
        %p230 = pneg %p94
        %p231 = pneg %p91
        %p232 = pneg %p115
        %p233 = pneg %p112
        %s234 = smul.u32 2, %s26
        %s235 = smul.u32 32, %s26
        %p237 = scmp.eq.s32.totalorder %s26, 0
        // Predicated region
        $region45: #{tpu_custom_call.1} parent=31 // pred_check
          %p238 = pneg %p237
        $region46: #{tpu_custom_call.1} parent=31 // pred_check_branch
          %240 = sbr.rel (%p238) target = $region48
        $region47: #{tpu_custom_call.1} parent=31 // pred_region
          %241 = vst [vmem:[#allocation2] sm:$0xff] 0.0
        $region48: #{tpu_custom_call.1} parent=31 // pred_fallthru
          _
        %v242 = vld [vmem:[#allocation2] sm:$0xff]
        %v243 = vld [vmem:[%s198] sm:$0xff]
        %v244 = vld [vmem:[%s207] sm:$0xf]
        %v245 = vld [vmem:[%s207 + $0x4] sm:$0xf]
        %v246 = vld [vmem:[%s207 + $0x8] sm:$0xf]
        %v247 = vld [vmem:[%s207 + $0xc] sm:$0xf]
        %v248 = vld [vmem:[%s207 + $0x10] sm:$0xf]
        %v249 = vld [vmem:[%s207 + $0x14] sm:$0xf]
        %v250 = vld [vmem:[%s207 + $0x18] sm:$0xf]
        %v251 = vld [vmem:[%s207 + $0x1c] sm:$0xf]
        %v252 = vld [vmem:[%s207 + $0x20] sm:$0xf]
        %v253 = vld [vmem:[%s207 + $0x24] sm:$0xf]
        %v254 = vld [vmem:[%s207 + $0x28] sm:$0xf]
        %v255 = vld [vmem:[%s207 + $0x2c] sm:$0xf]
        %v256 = vld [vmem:[%s207 + $0x30] sm:$0xf]
        %v257 = vld [vmem:[%s207 + $0x34] sm:$0xf]
        %v258 = vld [vmem:[%s207 + $0x38] sm:$0xf]
        %v259 = vld [vmem:[%s207 + $0x3c] sm:$0xf]
        %v260 = vld [vmem:[%s207 + $0x40] sm:$0xf]
        %v261 = vld [vmem:[%s207 + $0x44] sm:$0xf]
        %v262 = vld [vmem:[%s207 + $0x48] sm:$0xf]
        %v263 = vld [vmem:[%s207 + $0x4c] sm:$0xf]
        %v264 = vld [vmem:[%s207 + $0x50] sm:$0xf]
        %v265 = vld [vmem:[%s207 + $0x54] sm:$0xf]
        %v266 = vld [vmem:[%s207 + $0x58] sm:$0xf]
        %v267 = vld [vmem:[%s207 + $0x5c] sm:$0xf]
        %v268 = vld [vmem:[%s207 + $0x60] sm:$0xf]
        %v269 = vld [vmem:[%s207 + $0x64] sm:$0xf]
        %v270 = vld [vmem:[%s207 + $0x68] sm:$0xf]
        %v271 = vld [vmem:[%s207 + $0x6c] sm:$0xf]
        %v272 = vld [vmem:[%s207 + $0x70] sm:$0xf]
        %v273 = vld [vmem:[%s207 + $0x74] sm:$0xf]
        %v274 = vld [vmem:[%s207 + $0x78] sm:$0xf]
        %v275 = vld [vmem:[%s207 + $0x7c] sm:$0xf]
        %v277 = vunpack.c.l.b16 %v243
        %v278 = vunpack.c.h.b16 %v243
        %v279 = vpack.c.b16 %v277, %v277
        %v280 = vpack.c.b16 %v278, %v278
        %v315 = vunpack.c.l.b16 %v244
        %v316 = vunpack.c.l.b16 %v245
        %v317 = vunpack.c.l.b16 %v246
        %v318 = vunpack.c.l.b16 %v247
        %v319 = vunpack.c.l.b16 %v248
        %v320 = vunpack.c.l.b16 %v249
        %v321 = vunpack.c.l.b16 %v250
        %v322 = vunpack.c.l.b16 %v251
        %v323 = vunpack.c.l.b16 %v252
        %v324 = vunpack.c.l.b16 %v253
        %v325 = vunpack.c.l.b16 %v254
        %v326 = vunpack.c.l.b16 %v255
        %v327 = vunpack.c.l.b16 %v256
        %v328 = vunpack.c.l.b16 %v257
        %v329 = vunpack.c.l.b16 %v258
        %v330 = vunpack.c.l.b16 %v259
        %v331 = vunpack.c.l.b16 %v260
        %v332 = vunpack.c.l.b16 %v261
        %v333 = vunpack.c.l.b16 %v262
        %v334 = vunpack.c.l.b16 %v263
        %v335 = vunpack.c.l.b16 %v264
        %v336 = vunpack.c.l.b16 %v265
        %v337 = vunpack.c.l.b16 %v266
        %v338 = vunpack.c.l.b16 %v267
        %v339 = vunpack.c.l.b16 %v268
        %v340 = vunpack.c.l.b16 %v269
        %v341 = vunpack.c.l.b16 %v270
        %v342 = vunpack.c.l.b16 %v271
        %v343 = vunpack.c.l.b16 %v272
        %v344 = vunpack.c.l.b16 %v273
        %v345 = vunpack.c.l.b16 %v274
        %v346 = vunpack.c.l.b16 %v275
        %v347 = vpack.c.b16 %v316, %v315
        %v348 = vpack.c.b16 %v318, %v317
        %v349 = vpack.c.b16 %v320, %v319
        %v350 = vpack.c.b16 %v322, %v321
        %v351 = vpack.c.b16 %v324, %v323
        %v352 = vpack.c.b16 %v326, %v325
        %v353 = vpack.c.b16 %v328, %v327
        %v354 = vpack.c.b16 %v330, %v329
        %v355 = vpack.c.b16 %v332, %v331
        %v356 = vpack.c.b16 %v334, %v333
        %v357 = vpack.c.b16 %v336, %v335
        %v358 = vpack.c.b16 %v338, %v337
        %v359 = vpack.c.b16 %v340, %v339
        %v360 = vpack.c.b16 %v342, %v341
        %v361 = vpack.c.b16 %v344, %v343
        %v362 = vpack.c.b16 %v346, %v345
        %379 = vmatprep.subr.bf16.mxu0 0
        %380 = vmatpush1.bf16.msra.mxu0 %v347
        %381 = vmatprep.subr.bf16.mxu0 0
        %382 = vmatpush1.bf16.msra.mxu0 %v348
        %383 = vmatprep.subr.bf16.mxu0 0
        %384 = vmatpush1.bf16.msra.mxu0 %v349
        %385 = vmatprep.subr.bf16.mxu0 0
        %386 = vmatpush1.bf16.msra.mxu0 %v350
        %387 = vmatprep.subr.bf16.mxu0 0
        %388 = vmatpush1.bf16.msra.mxu0 %v351
        %389 = vmatprep.subr.bf16.mxu0 0
        %390 = vmatpush1.bf16.msra.mxu0 %v352
        %391 = vmatprep.subr.bf16.mxu0 0
        %392 = vmatpush1.bf16.msra.mxu0 %v353
        %393 = vmatprep.subr.bf16.mxu0 0
        %394 = vmatpush1.bf16.msra.mxu0 %v354
        %395 = vmatprep.subr.bf16.mxu0 0
        %396 = vmatpush1.bf16.msra.mxu0 %v355
        %397 = vmatprep.subr.bf16.mxu0 0
        %398 = vmatpush1.bf16.msra.mxu0 %v356
        %399 = vmatprep.subr.bf16.mxu0 0
        %400 = vmatpush1.bf16.msra.mxu0 %v357
        %401 = vmatprep.subr.bf16.mxu0 0
        %402 = vmatpush1.bf16.msra.mxu0 %v358
        %403 = vmatprep.subr.bf16.mxu0 0
        %404 = vmatpush1.bf16.msra.mxu0 %v359
        %405 = vmatprep.subr.bf16.mxu0 0
        %406 = vmatpush1.bf16.msra.mxu0 %v360
        %407 = vmatprep.subr.bf16.mxu0 0
        %408 = vmatpush1.bf16.msra.mxu0 %v361
        %409 = vmatprep.subr.bf16.mxu0 0
        %410 = vmatpush1.bf16.msra.mxu0 %v362
        %411 = vmatprep.mubr.bf16.mxu0 %v280
        %412 = vmatmul.mubr.bf16.gmra.mrb[0].mxu0 %v279
        %v413 = vpop.f32.mrb[0].mxu0
        %v414 = vadd.f32 0.0, %v413
        %v415 = vpop.f32.mrb[0].mxu0
        %v416 = vpop.f32.mrb[0].mxu0
        %v417 = vpop.f32.mrb[0].mxu0
        %418 = vdwg.mxu0
        %v419 = vadd.f32 %v242, %v414
        %420 = vst [vmem:[#allocation2] sm:$0xff] %v419
        %p421 = scmp.eq.s32.totalorder %s26, 2
        // Predicated region
        $region49: #{tpu_custom_call.1} parent=31 // pred_check
          %p422 = pneg %p421
        $region50: #{tpu_custom_call.1} parent=31 // pred_check_branch
          %424 = sbr.rel (%p422) target = $region52
        $region51: #{tpu_custom_call.1} parent=31 // pred_region
          %425 = vst [vmem:[#allocation3] sm:$0xff] 0.0
          %426 = vst [vmem:[#allocation3 + $0x8] sm:$0xff] 0.0
          %427 = vst [vmem:[#allocation3 + $0x10] sm:$0xff] 0.0
          %428 = vst [vmem:[#allocation3 + $0x18] sm:$0xff] 0.0
          %429 = vst [vmem:[#allocation3 + $0x20] sm:$0xff] 0.0
          %430 = vst [vmem:[#allocation3 + $0x28] sm:$0xff] 0.0
          %431 = vst [vmem:[#allocation3 + $0x30] sm:$0xff] 0.0
          %432 = vst [vmem:[#allocation3 + $0x38] sm:$0xff] 0.0
          %433 = vst [vmem:[#allocation3 + $0x40] sm:$0xff] 0.0
          %434 = vst [vmem:[#allocation3 + $0x48] sm:$0xff] 0.0
          %435 = vst [vmem:[#allocation3 + $0x50] sm:$0xff] 0.0
          %436 = vst [vmem:[#allocation3 + $0x58] sm:$0xff] 0.0
          %437 = vst [vmem:[#allocation3 + $0x60] sm:$0xff] 0.0
          %438 = vst [vmem:[#allocation3 + $0x68] sm:$0xff] 0.0
          %439 = vst [vmem:[#allocation3 + $0x70] sm:$0xff] 0.0
          %440 = vst [vmem:[#allocation3 + $0x78] sm:$0xff] 0.0
          %s441 = sld [smem:[#allocation5]]
          %s442 = scalar_lea.vmem [#allocation11], %s441
          %v443 = vld [vmem:[%s442] sm:$0x1]
          %s444 = sld [smem:[#allocation5 + $0x1]]
          %s445 = scalar_lea.vmem [#allocation11], %s444
          %v446 = vld [vmem:[%s445] sm:$0x1]
          %v447 = vadd.f32 %v443, %v446
          %s448 = sld [smem:[#allocation5 + $0x2]]
          %s449 = scalar_lea.vmem [#allocation11], %s448
          %v450 = vld [vmem:[%s449] sm:$0x1]
          %v451 = vadd.f32 %v447, %v450
          %s452 = sld [smem:[#allocation5 + $0x3]]
          %s453 = scalar_lea.vmem [#allocation11], %s452
          %v454 = vld [vmem:[%s453] sm:$0x1]
          %v455 = vadd.f32 %v451, %v454
          %s456 = sld [smem:[#allocation5 + $0x4]]
          %s457 = scalar_lea.vmem [#allocation11], %s456
          %v458 = vld [vmem:[%s457] sm:$0x1]
          %v459 = vadd.f32 %v455, %v458
          %s460 = sld [smem:[#allocation5 + $0x5]]
          %s461 = scalar_lea.vmem [#allocation11], %s460
          %v462 = vld [vmem:[%s461] sm:$0x1]
          %v463 = vadd.f32 %v459, %v462
          %s464 = sld [smem:[#allocation5 + $0x6]]
          %s465 = scalar_lea.vmem [#allocation11], %s464
          %v466 = vld [vmem:[%s465] sm:$0x1]
          %v467 = vadd.f32 %v463, %v466
          %s468 = sld [smem:[#allocation5 + $0x7]]
          %s469 = scalar_lea.vmem [#allocation11], %s468
          %v470 = vld [vmem:[%s469] sm:$0x1]
          %v471 = vadd.f32 %v467, %v470
          %472 = vst [vmem:[#allocation3] sm:$0x1] %v471
          %s473 = sld [smem:[#allocation5 + $0x8]]
          %s474 = scalar_lea.vmem [#allocation11], %s473
          %v475 = vld [vmem:[%s474] sm:$0x1]
          %s476 = sld [smem:[#allocation5 + $0x9]]
          %s477 = scalar_lea.vmem [#allocation11], %s476
          %v478 = vld [vmem:[%s477] sm:$0x1]
          %v479 = vadd.f32 %v475, %v478
          %s480 = sld [smem:[#allocation5 + $0xa]]
          %s481 = scalar_lea.vmem [#allocation11], %s480
          %v482 = vld [vmem:[%s481] sm:$0x1]
          %v483 = vadd.f32 %v479, %v482
          %s484 = sld [smem:[#allocation5 + $0xb]]
          %s485 = scalar_lea.vmem [#allocation11], %s484
          %v486 = vld [vmem:[%s485] sm:$0x1]
          %v487 = vadd.f32 %v483, %v486
          %s488 = sld [smem:[#allocation5 + $0xc]]
          %s489 = scalar_lea.vmem [#allocation11], %s488
          %v490 = vld [vmem:[%s489] sm:$0x1]
          %v491 = vadd.f32 %v487, %v490
          %s492 = sld [smem:[#allocation5 + $0xd]]
          %s493 = scalar_lea.vmem [#allocation11], %s492
          %v494 = vld [vmem:[%s493] sm:$0x1]
          %v495 = vadd.f32 %v491, %v494
          %s496 = sld [smem:[#allocation5 + $0xe]]
          %s497 = scalar_lea.vmem [#allocation11], %s496
          %v498 = vld [vmem:[%s497] sm:$0x1]
          %v499 = vadd.f32 %v495, %v498
          %s500 = sld [smem:[#allocation5 + $0xf]]
          %s501 = scalar_lea.vmem [#allocation11], %s500
          %v502 = vld [vmem:[%s501] sm:$0x1]
          %v503 = vadd.f32 %v499, %v502
          %504 = vst [vmem:[#allocation3 + $0x1] sm:$0x1] %v503
          %v505 = vld [vmem:[#allocation2] sm:$0xff]
          %v506 = vld [vmem:[#allocation3] sm:$0xff]
          %v507 = vld [vmem:[#allocation3 + $0x8] sm:$0xff]
          %v508 = vld [vmem:[#allocation3 + $0x10] sm:$0xff]
          %v509 = vld [vmem:[#allocation3 + $0x18] sm:$0xff]
          %v510 = vld [vmem:[#allocation3 + $0x20] sm:$0xff]
          %v511 = vld [vmem:[#allocation3 + $0x28] sm:$0xff]
          %v512 = vld [vmem:[#allocation3 + $0x30] sm:$0xff]
          %v513 = vld [vmem:[#allocation3 + $0x38] sm:$0xff]
          %v514 = vld [vmem:[#allocation3 + $0x40] sm:$0xff]
          %v515 = vld [vmem:[#allocation3 + $0x48] sm:$0xff]
          %v516 = vld [vmem:[#allocation3 + $0x50] sm:$0xff]
          %v517 = vld [vmem:[#allocation3 + $0x58] sm:$0xff]
          %v518 = vld [vmem:[#allocation3 + $0x60] sm:$0xff]
          %v519 = vld [vmem:[#allocation3 + $0x68] sm:$0xff]
          %v520 = vld [vmem:[#allocation3 + $0x70] sm:$0xff]
          %v521 = vld [vmem:[#allocation3 + $0x78] sm:$0xff]
          %v522 = vmul.f32 %v505, %v505
          %523 = vadd.xlane.f32.xlu0 %v522
          %v524 = vpop.xlane.xlu0 %523
          %v525 = vadd.f32 %v524, 1e-12
          %v526 = vrsqrt.pop %v525
          %v527 = vmul.f32 %v505, %v526
          %v528 = vmul.f32 %v506, %v506
          %v529 = vmul.f32 %v507, %v507
          %v530 = vmul.f32 %v508, %v508
          %v531 = vmul.f32 %v509, %v509
          %v532 = vmul.f32 %v510, %v510
          %v533 = vmul.f32 %v511, %v511
          %v534 = vmul.f32 %v512, %v512
          %v535 = vmul.f32 %v513, %v513
          %v536 = vmul.f32 %v514, %v514
          %v537 = vmul.f32 %v515, %v515
          %v538 = vmul.f32 %v516, %v516
          %v539 = vmul.f32 %v517, %v517
          %v540 = vmul.f32 %v518, %v518
          %v541 = vmul.f32 %v519, %v519
          %v542 = vmul.f32 %v520, %v520
          %v543 = vmul.f32 %v521, %v521
          %544 = vadd.xlane.f32.xlu0 %v528
          %v545 = vpop.xlane.xlu0 %544
          %546 = vadd.xlane.f32.xlu0 %v529
          %v547 = vpop.xlane.xlu0 %546
          %548 = vadd.xlane.f32.xlu0 %v530
          %v549 = vpop.xlane.xlu0 %548
          %550 = vadd.xlane.f32.xlu0 %v531
          %v551 = vpop.xlane.xlu0 %550
          %552 = vadd.xlane.f32.xlu0 %v532
          %v553 = vpop.xlane.xlu0 %552
          %554 = vadd.xlane.f32.xlu0 %v533
          %v555 = vpop.xlane.xlu0 %554
          %556 = vadd.xlane.f32.xlu0 %v534
          %v557 = vpop.xlane.xlu0 %556
          %558 = vadd.xlane.f32.xlu0 %v535
          %v559 = vpop.xlane.xlu0 %558
          %560 = vadd.xlane.f32.xlu0 %v536
          %v561 = vpop.xlane.xlu0 %560
          %562 = vadd.xlane.f32.xlu0 %v537
          %v563 = vpop.xlane.xlu0 %562
          %564 = vadd.xlane.f32.xlu0 %v538
          %v565 = vpop.xlane.xlu0 %564
          %566 = vadd.xlane.f32.xlu0 %v539
          %v567 = vpop.xlane.xlu0 %566
          %568 = vadd.xlane.f32.xlu0 %v540
          %v569 = vpop.xlane.xlu0 %568
          %570 = vadd.xlane.f32.xlu0 %v541
          %v571 = vpop.xlane.xlu0 %570
          %572 = vadd.xlane.f32.xlu0 %v542
          %v573 = vpop.xlane.xlu0 %572
          %574 = vadd.xlane.f32.xlu0 %v543
          %v575 = vpop.xlane.xlu0 %574
          %v576 = vadd.f32 %v545, 1e-12
          %v577 = vadd.f32 %v547, 1e-12
          %v578 = vadd.f32 %v549, 1e-12
          %v579 = vadd.f32 %v551, 1e-12
          %v580 = vadd.f32 %v553, 1e-12
          %v581 = vadd.f32 %v555, 1e-12
          %v582 = vadd.f32 %v557, 1e-12
          %v583 = vadd.f32 %v559, 1e-12
          %v584 = vadd.f32 %v561, 1e-12
          %v585 = vadd.f32 %v563, 1e-12
          %v586 = vadd.f32 %v565, 1e-12
          %v587 = vadd.f32 %v567, 1e-12
          %v588 = vadd.f32 %v569, 1e-12
          %v589 = vadd.f32 %v571, 1e-12
          %v590 = vadd.f32 %v573, 1e-12
          %v591 = vadd.f32 %v575, 1e-12
          %v592 = vrsqrt.pop %v576
          %v593 = vrsqrt.pop %v577
          %v594 = vrsqrt.pop %v578
          %v595 = vrsqrt.pop %v579
          %v596 = vrsqrt.pop %v580
          %v597 = vrsqrt.pop %v581
          %v598 = vrsqrt.pop %v582
          %v599 = vrsqrt.pop %v583
          %v600 = vrsqrt.pop %v584
          %v601 = vrsqrt.pop %v585
          %v602 = vrsqrt.pop %v586
          %v603 = vrsqrt.pop %v587
          %v604 = vrsqrt.pop %v588
          %v605 = vrsqrt.pop %v589
          %v606 = vrsqrt.pop %v590
          %v607 = vrsqrt.pop %v591
          %v608 = vmul.f32 %v506, %v592
          %v609 = vmul.f32 %v507, %v593
          %v610 = vmul.f32 %v508, %v594
          %v611 = vmul.f32 %v509, %v595
          %v612 = vmul.f32 %v510, %v596
          %v613 = vmul.f32 %v511, %v597
          %v614 = vmul.f32 %v512, %v598
          %v615 = vmul.f32 %v513, %v599
          %v616 = vmul.f32 %v514, %v600
          %v617 = vmul.f32 %v515, %v601
          %v618 = vmul.f32 %v516, %v602
          %v619 = vmul.f32 %v517, %v603
          %v620 = vmul.f32 %v518, %v604
          %v621 = vmul.f32 %v519, %v605
          %v622 = vmul.f32 %v520, %v606
          %v623 = vmul.f32 %v521, %v607
          %624 = vmatprep.subr.mxu0 0.0
          %625 = vmatpush1.xpose.msra.mxu0 %v608
          %626 = vmatprep.subr.mxu0 0.0
          %627 = vmatpush1.xpose.msra.mxu0 %v609
          %628 = vmatprep.subr.mxu0 0.0
          %629 = vmatpush1.xpose.msra.mxu0 %v610
          %630 = vmatprep.subr.mxu0 0.0
          %631 = vmatpush1.xpose.msra.mxu0 %v611
          %632 = vmatprep.subr.mxu0 0.0
          %633 = vmatpush1.xpose.msra.mxu0 %v612
          %634 = vmatprep.subr.mxu0 0.0
          %635 = vmatpush1.xpose.msra.mxu0 %v613
          %636 = vmatprep.subr.mxu0 0.0
          %637 = vmatpush1.xpose.msra.mxu0 %v614
          %638 = vmatprep.subr.mxu0 0.0
          %639 = vmatpush1.xpose.msra.mxu0 %v615
          %640 = vmatprep.subr.mxu0 0.0
          %641 = vmatpush1.xpose.msra.mxu0 %v616
          %642 = vmatprep.subr.mxu0 0.0
          %643 = vmatpush1.xpose.msra.mxu0 %v617
          %644 = vmatprep.subr.mxu0 0.0
          %645 = vmatpush1.xpose.msra.mxu0 %v618
          %646 = vmatprep.subr.mxu0 0.0
          %647 = vmatpush1.xpose.msra.mxu0 %v619
          %648 = vmatprep.subr.mxu0 0.0
          %649 = vmatpush1.xpose.msra.mxu0 %v620
          %650 = vmatprep.subr.mxu0 0.0
          %651 = vmatpush1.xpose.msra.mxu0 %v621
          %652 = vmatprep.subr.mxu0 0.0
          %653 = vmatpush1.xpose.msra.mxu0 %v622
          %654 = vmatprep.subr.mxu0 0.0
          %655 = vmatpush1.xpose.msra.mxu0 %v623
          %656 = vmatprep.subr.mxu0 0.0
          %657 = vmatpush1.xpose.msra.mxu0 0.0
          %658 = vmatprep.subr.mxu0 0.0
          %659 = vmatpush1.xpose.msra.mxu0 0.0
          %660 = vmatprep.subr.mxu0 0.0
          %661 = vmatpush1.xpose.msra.mxu0 0.0
          %662 = vmatprep.subr.mxu0 0.0
          %663 = vmatpush1.xpose.msra.mxu0 0.0
          %664 = vmatprep.subr.mxu0 0.0
          %665 = vmatpush1.xpose.msra.mxu0 0.0
          %666 = vmatprep.subr.mxu0 0.0
          %667 = vmatpush1.xpose.msra.mxu0 0.0
          %668 = vmatprep.subr.mxu0 0.0
          %669 = vmatpush1.xpose.msra.mxu0 0.0
          %670 = vmatprep.subr.mxu0 0.0
          %671 = vmatpush1.xpose.msra.mxu0 0.0
          %672 = vmatprep.subr.mxu0 0.0
          %673 = vmatpush1.xpose.msra.mxu0 0.0
          %674 = vmatprep.subr.mxu0 0.0
          %675 = vmatpush1.xpose.msra.mxu0 0.0
          %676 = vmatprep.subr.mxu0 0.0
          %677 = vmatpush1.xpose.msra.mxu0 0.0
          %678 = vmatprep.subr.mxu0 0.0
          %679 = vmatpush1.xpose.msra.mxu0 0.0
          %680 = vmatprep.subr.mxu0 0.0
          %681 = vmatpush1.xpose.msra.mxu0 0.0
          %682 = vmatprep.subr.mxu0 0.0
          %683 = vmatpush1.xpose.msra.mxu0 0.0
          %684 = vmatprep.subr.mxu0 0.0
          %685 = vmatpush1.xpose.msra.mxu0 0.0
          %686 = vmatprep.subr.mxu0 0.0
          %687 = vmatpush1.xpose.msra.mxu0 0.0
          %688 = vmatprep.mubr.f32.mxu0 0.0
          %689 = vmatmul.mubr.f32.gmra.mrb[0].mxu0 %v527
          %v690 = vpop.f32.mrb[0].mxu0
          %v691 = vadd.f32 0.0, %v690
          %v692 = vpop.f32.mrb[0].mxu0
          %693 = vdwg.mxu0
          %v694 = vmul.f32 %v691, 0.14285713
          %v695 = vsub.f32 1.0, %v694
          %696 = vst [vmem:[#allocation12] sm:$0xff] %v695
        $region52: #{tpu_custom_call.1} parent=31 // pred_fallthru
          _
        // Predicated region
        $region53: #{tpu_custom_call.1} parent=31 // pred_check
          %p697 = pneg %p112
        $region54: #{tpu_custom_call.1} parent=31 // pred_check_branch
          %699 = sbr.rel (%p697) target = $region56
        $region55: #{tpu_custom_call.1} parent=31 // pred_region
          %s701 = ssub.s32 128, 128
          %702 = vsyncadd [#allocation8], %s701
          %s704 = sshll.u32 [#allocation12], 4
          %s705 = int_to_ptr.vmem [resolvable:$true] %s704
          %707 = dma.vmem_to_hbm [thread:$0]  %s705, 128, %s4, [#allocation8]
        $region56: #{tpu_custom_call.1} parent=31 // pred_fallthru
          _
        // Predicated region
        $region57: #{tpu_custom_call.1} parent=31 // pred_check
          %p708 = pneg %p112
        $region58: #{tpu_custom_call.1} parent=31 // pred_check_branch
          %710 = sbr.rel (%p708) target = $region60
        $region59: #{tpu_custom_call.1} parent=31 // pred_region
          %711 = dma.done [#allocation8], 128
        $region60: #{tpu_custom_call.1} parent=31 // pred_fallthru
          _
      $region32: #{tpu_custom_call.1} parent=5 // pred_fallthru
        _
      %p712 = scmp.le.s32.totalorder 2, %s21
      // Predicated region
      $region61: #{tpu_custom_call.1} parent=5 // pred_check
        %p713 = pneg %p712
      $region62: #{tpu_custom_call.1} parent=5 // pred_check_branch
        %715 = sbr.rel (%p713) target = $region64
      $region63: #{tpu_custom_call.1} parent=5 // pred_region
        %s716 = ssub.s32 %s21, 2
      $region64: #{tpu_custom_call.1} parent=5 // pred_fallthru
        _
    $region6: #{tpu_custom_call.1} parent=1 // loop_footer
      %s25 = sadd.s32 1, %s21
    $region7: #{tpu_custom_call.1} parent=1 // loop_footer_branch
      %20 = sbr.rel target = $region3
    $region8: #{tpu_custom_call.1} parent=1 // loop_exit
      _
    %717 = vsyncpa [#allocation7], 1
    %s718 = scalar_lea.sflag [#allocation7], 1
    %719 = vsyncpa %s718, 1
    %720 = vsyncpa [#allocation10], 1
    %s721 = scalar_lea.sflag [#allocation10], 1
    %722 = vsyncpa %s721, 1
    %723 = vsyncpa [#allocation8], 1
    %s724 = scalar_lea.sflag [#allocation8], 1
    %725 = vsyncpa %s724, 1

</llo_original>
